<compile_context>
chip_gen: v7x
topology: tpu7x:2x2x1
jax: 0.10.0
libtpu: 0.0.40
codegen_flags: <defaults>
</compile_context>

<pallas_src>
import math

import jax
import jax.numpy as jnp
from jax.experimental import pallas as pl
from jax.experimental.pallas import tpu as pltpu

# -log(1e-4): log of the clipped off-label one-hot entries.
_NEG_LOG_EPS = -math.log(1e-4)


def _rce_kernel(logits_ref, side_ref, rce_ref):
    # (TN, C) logits tile; softmax over the lane (class) axis in f32.
    logits = logits_ref[...].astype(jnp.float32)
    m = jnp.max(logits, axis=1, keepdims=True)                  # (TN, 1) XLU
    e = jnp.exp(logits - m)                                     # (TN, C) EUP
    denom = jnp.sum(e, axis=1, keepdims=True)                   # (TN, 1) XLU
    inv = pl.reciprocal(denom, approx=False)                    # (TN, 1)
    score = jnp.clip(e * inv, 1e-7, 1.0)                        # clamped softmax

    side = side_ref[...]                                        # (TN, 2) f32
    labels = side[:, 0:1].astype(jnp.int32)                     # label as f32 (exact for C < 2^24)
    w_eff = side[:, 1:2]                                        # -log(1e-4) * cls_weight[label]; 0 on pad rows

    class_ids = jax.lax.broadcasted_iota(jnp.int32, score.shape, 1)
    # score * log(clipped one-hot) == log(1e-4) * score off the label, 0 at it,
    # so rce = -log(1e-4) * sum(off-label score); the constant is folded into w_eff.
    off_label = jnp.where(class_ids == labels, 0.0, score)      # (TN, C)
    rce_ref[...] = jnp.sum(off_label, axis=1, keepdims=True) * w_eff


def _plan_tiling(n, c, in_dtype):
    """Pick (tile_n, num_steps, vmem_limit_bytes) for the current generation."""
    itemsize = jnp.dtype(in_dtype).itemsize
    sub = 8 * max(1, 4 // itemsize)            # sublane multiple: 8 f32, 16 bf16

    # Generation-aware VMEM budget. The real per-step cost is roughly
    # 2x double-buffered input tile + ~4x f32 elementwise temporaries,
    # so budget on the f32 working-set tile (tile_n * C * 4 bytes).
    try:
        vmem_cap = pltpu.get_tpu_info().vmem_capacity_bytes
    except Exception:  # be conservative if the query is unavailable
        vmem_cap = 64 << 20
    if vmem_cap >= (100 << 20):                # v5e / v6e: 128 MiB VMEM
        f32_tile_budget = 12 << 20
        vmem_limit = 72 << 20
    else:                                      # v7x: 64 MiB VMEM
        f32_tile_budget = 6 << 20
        vmem_limit = 44 << 20

    budget_rows = max(sub, (f32_tile_budget // max(c * 4, 1)) // sub * sub)

    # At least 2 grid steps when the batch allows it (v7x megacore split of the
    # "parallel" axis), and balance rows across steps to keep padding small.
    min_steps = 2 if n >= 2 * sub else 1
    steps = max(pl.cdiv(n, budget_rows), min_steps)
    tile_n = pl.cdiv(pl.cdiv(n, steps), sub) * sub
    steps = pl.cdiv(n, tile_n)
    return tile_n, steps, vmem_limit


def reverse_cross_entropy(logits, labels, cls_weight, *, scale=1.0,
                          reduction="mean", tile_n=None):
    n, c = logits.shape
    tn, steps, vmem_limit = _plan_tiling(n, c, logits.dtype)
    if tile_n is not None:
        tn = tile_n
        steps = pl.cdiv(n, tn)
    padded_n = steps * tn

    # Hoist the per-class weight gather out of the kernel and fold -log(1e-4)
    # into it; merge labels + effective weights into a single (N, 2) side stream.
    w_eff = cls_weight.astype(jnp.float32)[labels] * jnp.float32(_NEG_LOG_EPS)
    side = jnp.stack([labels.astype(jnp.float32), w_eff], axis=1)       # (N, 2)

    if padded_n != n:
        pad = padded_n - n
        logits = jnp.pad(logits, ((0, pad), (0, 0)))
        side = jnp.pad(side, ((0, pad), (0, 0)))    # padded rows: w_eff = 0

    rce = pl.pallas_call(
        _rce_kernel,
        out_shape=jax.ShapeDtypeStruct((padded_n, 1), jnp.float32),
        grid=(steps,),
        in_specs=[
            pl.BlockSpec((tn, c), lambda i: (i, 0)),     # logits tile (native dtype)
            pl.BlockSpec((tn, 2), lambda i: (i, 0)),     # [label, w_eff] tile
        ],
        out_specs=pl.BlockSpec((tn, 1), lambda i: (i, 0)),   # per-row weighted rce
        compiler_params=pltpu.CompilerParams(
            dimension_semantics=("parallel",),
            vmem_limit_bytes=vmem_limit,
        ),
    )(logits, side)

    rce = rce[:n, 0]
    red = jnp.mean(rce) if reduction == "mean" else jnp.sum(rce)
    return jnp.float32(scale) * red


def _reference(logits, labels, cls_weight, scale, reduction):
    logits = logits.astype(jnp.float32)
    score = jax.nn.softmax(logits, axis=1)
    score = jnp.clip(score, 1e-7, 1.0)
    oh = jax.nn.one_hot(labels, logits.shape[1], dtype=jnp.float32)
    oh = jnp.clip(oh, 1e-4, 1.0)
    rce = -jnp.sum(score * jnp.log(oh), axis=1)
    rce = rce * cls_weight[labels]
    red = jnp.mean(rce) if reduction == "mean" else jnp.sum(rce)
    return scale * red


if __name__ == "__main__":
    N, C = 32, 16
    scale = 1.0
    reduction = "mean"

    key = jax.random.PRNGKey(0)
    k_logits, k_labels = jax.random.split(key)
    logits = jax.random.normal(k_logits, (N, C), dtype=jnp.float32)
    labels = jax.random.randint(k_labels, (N,), 0, C, dtype=jnp.int32)
    # Module default is weight=None (all-ones); use a non-trivial deterministic
    # vector to exercise the WeightAttachment path.
    cls_weight = 0.5 + jnp.arange(C, dtype=jnp.float32) / C

    # f32 path
    out = reverse_cross_entropy(logits, labels, cls_weight,
                                scale=scale, reduction=reduction)
    out = jax.block_until_ready(out)
    ref = _reference(logits, labels, cls_weight, scale, reduction)
    assert jnp.allclose(out, ref, rtol=1e-5, atol=1e-5), (out, ref)

    # bf16 logits path (kernel upcasts to f32 internally).
    logits_bf16 = logits.astype(jnp.bfloat16)
    out_bf16 = reverse_cross_entropy(logits_bf16, labels, cls_weight,
                                     scale=scale, reduction=reduction)
    out_bf16 = jax.block_until_ready(out_bf16)
    ref_bf16 = _reference(logits_bf16, labels, cls_weight, scale, reduction)
    assert jnp.allclose(out_bf16, ref_bf16, rtol=1e-5, atol=1e-5), (out_bf16, ref_bf16)

    print("KERNEL_OK")
</pallas_src>

<mosaic_0001>
module attributes {stable_mosaic.version = 11 : i64} {
  func.func @_rce_kernel(%arg0: i32, %arg1: memref<16x16xf32, #tpu.memory_space<vmem>>, %arg2: memref<16x2xf32, #tpu.memory_space<vmem>>, %arg3: memref<16x1xf32, #tpu.memory_space<vmem>>) attributes {dimension_semantics = [#tpu.dimension_semantics<parallel>], iteration_bounds = array<i64: 2>, scalar_prefetch = 0 : i64, scratch_operands = 0 : i64, tpu.core_type = #tpu.core_type<tc>, window_params = [{transform_indices = @transform_0, window_bounds = array<i64: 16, 16>}, {transform_indices = @transform_1, window_bounds = array<i64: 16, 2>}, {transform_indices = @transform_2, window_bounds = array<i64: 16, 1>}]} {
    %c0 = arith.constant 0 : index
    %c0_0 = arith.constant 0 : index
    %0 = vector.load %arg1[%c0, %c0_0] : memref<16x16xf32, #tpu.memory_space<vmem>>, vector<16x16xf32>
    %cst = arith.constant dense<0xFF800000> : vector<16xf32>
    %1 = vector.multi_reduction <maximumf>, %0, %cst [1] : vector<16x16xf32> to vector<16xf32>
    %2 = vector.shape_cast %1 : vector<16xf32> to vector<16x1xf32>
    %3 = vector.broadcast %2 : vector<16x1xf32> to vector<16x16xf32>
    %4 = arith.subf %0, %3 : vector<16x16xf32>
    %5 = math.exp %4 : vector<16x16xf32>
    %cst_1 = arith.constant dense<0.000000e+00> : vector<16xf32>
    %6 = vector.multi_reduction <add>, %5, %cst_1 [1] : vector<16x16xf32> to vector<16xf32>
    %7 = vector.shape_cast %6 : vector<16xf32> to vector<16x1xf32>
    %8 = tpu.reciprocal %7 : vector<16x1xf32> -> vector<16x1xf32>
    %9 = vector.broadcast %8 : vector<16x1xf32> to vector<16x16xf32>
    %10 = arith.mulf %5, %9 : vector<16x16xf32>
    %cst_2 = arith.constant 1.000000e-07 : f32
    %cst_3 = arith.constant 1.000000e+00 : f32
    %11 = vector.broadcast %cst_2 : f32 to vector<16x16xf32>
    %12 = arith.maximumf %11, %10 : vector<16x16xf32>
    %13 = vector.broadcast %cst_3 : f32 to vector<16x16xf32>
    %14 = arith.minimumf %13, %12 : vector<16x16xf32>
    %c0_4 = arith.constant 0 : index
    %c0_5 = arith.constant 0 : index
    %15 = vector.load %arg2[%c0_4, %c0_5] : memref<16x2xf32, #tpu.memory_space<vmem>>, vector<16x2xf32>
    %16 = vector.extract_strided_slice %15 {offsets = [0, 0], sizes = [16, 1], strides = [1, 1]} : vector<16x2xf32> to vector<16x1xf32>
    %17 = arith.fptosi %16 : vector<16x1xf32> to vector<16x1xi32>
    %18 = vector.extract_strided_slice %15 {offsets = [0, 1], sizes = [16, 1], strides = [1, 1]} : vector<16x2xf32> to vector<16x1xf32>
    %19 = tpu.iota {dimensions = array<i32: 1>} : vector<16x16xi32>
    %20 = vector.broadcast %17 : vector<16x1xi32> to vector<16x16xi32>
    %21 = arith.cmpi eq, %19, %20 : vector<16x16xi32>
    %cst_6 = arith.constant 0.000000e+00 : f32
    %22 = vector.broadcast %cst_6 : f32 to vector<16x16xf32>
    %23 = arith.select %21, %22, %14 : vector<16x16xi1>, vector<16x16xf32>
    %cst_7 = arith.constant dense<0.000000e+00> : vector<16xf32>
    %24 = vector.multi_reduction <add>, %23, %cst_7 [1] : vector<16x16xf32> to vector<16xf32>
    %25 = vector.shape_cast %24 : vector<16xf32> to vector<16x1xf32>
    %26 = arith.mulf %25, %18 : vector<16x1xf32>
    %c0_8 = arith.constant 0 : index
    %c0_9 = arith.constant 0 : index
    %27 = vector.load %arg3[%c0_8, %c0_9] : memref<16x1xf32, #tpu.memory_space<vmem>>, vector<16x1xf32>
    tpu.vector_store %arg3[%c0_8, %c0_9], %26 {strides = array<i32>} : memref<16x1xf32, #tpu.memory_space<vmem>>, vector<16x1xf32>,
    return
  }
  func.func @transform_0(%arg0: i32) -> (i32, i32) {
    %c0_i32 = arith.constant 0 : i32
    %c0_i32_0 = arith.constant 0 : i32
    return %arg0, %c0_i32 : i32, i32
  }
  func.func @transform_1(%arg0: i32) -> (i32, i32) {
    %c0_i32 = arith.constant 0 : i32
    %c0_i32_0 = arith.constant 0 : i32
    return %arg0, %c0_i32 : i32, i32
  }
  func.func @transform_2(%arg0: i32) -> (i32, i32) {
    %c0_i32 = arith.constant 0 : i32
    %c0_i32_0 = arith.constant 0 : i32
    return %arg0, %c0_i32 : i32, i32
  }
}

</mosaic_0001>

<llo_original>
// kernel: tpu_custom_call.1
$region0: #{tpu_custom_call.1}
  #allocation0 [shape = 'u32[]', space=smem, size = 0x4, offset = 0x4, fixed_abs, tag = 'smem constant byte address 0x4 - core index']
  #allocation1 [shape = 'u32[144,128]{1,0:T(1,128)}', space=vmem, size = 0x12000, scoped, tag = 'internal scratch']
  %s0 = inlined_call_operand.vmem [shape: f32[32,16], index: 0, kind: input, shape index: {}]
  %s1 = inlined_call_operand.vmem [shape: f32[32,2], index: 1, kind: input, shape index: {}]
  %s2 = inlined_call_operand.vmem [shape: f32[32,1], index: 2, kind: output, shape index: {}]
  %s3 = sld [smem:[#allocation0]]
  $region41: #{tpu_custom_call.1} parent=0
    _
  %s5 = ssub.s32 1, %s3
  %s6 = scalar_select 0, %s5, %s3
  loop: start=0, step=1, limit=4
  $region2: #{tpu_custom_call.1} parent=0 // loop_pre_header
    _
  $region3: #{tpu_custom_call.1} parent=0 // loop_header
    %s8 = sphi 0, %s12
    %p9 = scmp.ge.s32.totalorder %s8, 4
    %s18 = sphi 0, %s20
    %s21 = sphi 0, %s18
    %s22 = sphi 0, %s21
    %s38 = sphi 0, %s22
    %s44 = sphi 0, %s46
    %s47 = sphi 0, %s44
    %s48 = sphi 0, %s47
    %s64 = sphi 0, %s48
    %s70 = sphi 0, %s72
    %s73 = sphi 0, %s70
    %s74 = sphi 0, %s73
    %s90 = sphi 0, %s74
  $region4: #{tpu_custom_call.1} parent=0 // loop_header_branch
    %11 = sbr.rel (%p9) target = $region8
  $region5: #{tpu_custom_call.1} parent=0 // loop_body
    %s13 = ssub.s32 %s8, 1
    %s14 = ssub.s32 %s8, 2
    %s15 = sadd.s32 %s8, 1
    %s16 = ssub.s32 %s8, %s15
    %p17 = scmp.eq.s32.totalorder %s16, 0
    %s19 = sadd.s32 %s18, 1
    %s20 = scalar_select %p17, %s18, %s19
    %p23 = pneg %p17
    %p24 = scmp.eq.s32.totalorder %s8, 1
    %p25 = por %p23, %p24
    %p26 = scmp.ne.s32.totalorder %s18, %s21
    %p27 = scmp.eq.s32.totalorder %s8, 0
    %p28 = por %p26, %p27
    %p29 = scmp.ne.s32.totalorder %s18, %s21
    %p30 = scmp.eq.s32.totalorder %s13, 1
    %p31 = por %p29, %p30
    %p32 = scmp.ne.s32.totalorder %s21, %s22
    %p33 = scmp.eq.s32.totalorder %s13, 0
    %p34 = por %p32, %p33
    %p35 = scmp.ne.s32.totalorder %s21, %s22
    %p36 = scmp.eq.s32.totalorder %s14, 1
    %p37 = por %p35, %p36
    %p39 = scmp.ne.s32.totalorder %s22, %s38
    %p40 = scmp.eq.s32.totalorder %s14, 0
    %p41 = por %p39, %p40
    %s42 = ssub.s32 %s8, %s15
    %p43 = scmp.eq.s32.totalorder %s42, 0
    %s45 = sadd.s32 %s44, 1
    %s46 = scalar_select %p43, %s44, %s45
    %p49 = pneg %p43
    %p50 = scmp.eq.s32.totalorder %s8, 1
    %p51 = por %p49, %p50
    %p52 = scmp.ne.s32.totalorder %s44, %s47
    %p53 = scmp.eq.s32.totalorder %s8, 0
    %p54 = por %p52, %p53
    %p55 = scmp.ne.s32.totalorder %s44, %s47
    %p56 = scmp.eq.s32.totalorder %s13, 1
    %p57 = por %p55, %p56
    %p58 = scmp.ne.s32.totalorder %s47, %s48
    %p59 = scmp.eq.s32.totalorder %s13, 0
    %p60 = por %p58, %p59
    %p61 = scmp.ne.s32.totalorder %s47, %s48
    %p62 = scmp.eq.s32.totalorder %s14, 1
    %p63 = por %p61, %p62
    %p65 = scmp.ne.s32.totalorder %s48, %s64
    %p66 = scmp.eq.s32.totalorder %s14, 0
    %p67 = por %p65, %p66
    %s68 = ssub.s32 %s8, %s15
    %p69 = scmp.eq.s32.totalorder %s68, 0
    %s71 = sadd.s32 %s70, 1
    %s72 = scalar_select %p69, %s70, %s71
    %p75 = pneg %p69
    %p76 = scmp.eq.s32.totalorder %s8, 1
    %p77 = por %p75, %p76
    %p78 = scmp.ne.s32.totalorder %s70, %s73
    %p79 = scmp.eq.s32.totalorder %s8, 0
    %p80 = por %p78, %p79
    %p81 = scmp.ne.s32.totalorder %s70, %s73
    %p82 = scmp.eq.s32.totalorder %s13, 1
    %p83 = por %p81, %p82
    %p84 = scmp.ne.s32.totalorder %s73, %s74
    %p85 = scmp.eq.s32.totalorder %s13, 0
    %p86 = por %p84, %p85
    %p87 = scmp.ne.s32.totalorder %s73, %s74
    %p88 = scmp.eq.s32.totalorder %s14, 1
    %p89 = por %p87, %p88
    %p91 = scmp.ne.s32.totalorder %s74, %s90
    %p92 = scmp.eq.s32.totalorder %s14, 0
    %p93 = por %p91, %p92
    %p94 = scmp.le.s32.totalorder 1, %s8
    %p95 = scmp.lt.s32.totalorder %s8, 3
    %p96 = pnand %p94, %p95
    %p97 = pneg %p96
    // Predicated region
    $region9: #{tpu_custom_call.1} parent=5 // pred_check
      _
    $region10: #{tpu_custom_call.1} parent=5 // pred_check_branch
      %99 = sbr.rel (%p96) target = $region12
    $region11: #{tpu_custom_call.1} parent=5 // pred_region
      %s100 = ssub.s32 %s8, 1
    $region12: #{tpu_custom_call.1} parent=5 // pred_fallthru
      _
    %p101 = scmp.lt.s32.totalorder %s8, 2
    // Predicated region
    $region13: #{tpu_custom_call.1} parent=5 // pred_check
      %p102 = pneg %p101
    $region14: #{tpu_custom_call.1} parent=5 // pred_check_branch
      %104 = sbr.rel (%p102) target = $region16
    $region15: #{tpu_custom_call.1} parent=5 // pred_region
      // Predicated region
      $region17: #{tpu_custom_call.1} parent=15 // pred_check
        %p105 = pneg %p28
      $region18: #{tpu_custom_call.1} parent=15 // pred_check_branch
        %107 = sbr.rel (%p105) target = $region20
      $region19: #{tpu_custom_call.1} parent=15 // pred_region
        %s108 = smul.u32 2, %s8
        %p109 = scmp.lt.s32.totalorder %s108, 3
        %s110 = scalar_select %p109, %s108, 3
        %s111 = smul.addr %s110, 8
        %s112 = scalar_lea.vmem %s0, %s111
        %s113 = smul.u32 2, %s8
      $region20: #{tpu_custom_call.1} parent=15 // pred_fallthru
        _
      // Predicated region
      $region21: #{tpu_custom_call.1} parent=15 // pred_check
        %p114 = pneg %p54
      $region22: #{tpu_custom_call.1} parent=15 // pred_check_branch
        %116 = sbr.rel (%p114) target = $region24
      $region23: #{tpu_custom_call.1} parent=15 // pred_region
        %s117 = smul.u32 2, %s8
        %p118 = scmp.lt.s32.totalorder %s117, 3
        %s119 = scalar_select %p118, %s117, 3
        %s120 = smul.addr %s119, 8
        %s121 = scalar_lea.vmem %s1, %s120
        %s122 = smul.u32 2, %s8
      $region24: #{tpu_custom_call.1} parent=15 // pred_fallthru
        _
    $region16: #{tpu_custom_call.1} parent=5 // pred_fallthru
      _
    %p123 = scmp.le.s32.totalorder 1, %s8
    %p124 = scmp.lt.s32.totalorder %s8, 3
    %p125 = pnand %p123, %p124
    %p126 = pneg %p125
    // Predicated region
    $region25: #{tpu_custom_call.1} parent=5 // pred_check
      _
    $region26: #{tpu_custom_call.1} parent=5 // pred_check_branch
      %128 = sbr.rel (%p125) target = $region28
    $region27: #{tpu_custom_call.1} parent=5 // pred_region
      %s129 = ssub.s32 %s8, 1
      %s130 = smul.u32 2, %s13
      %p131 = scmp.lt.s32.totalorder %s130, 3
      %s132 = scalar_select %p131, %s130, 3
      %s133 = smul.addr %s132, 8
      %s134 = scalar_lea.vmem %s0, %s133
      %p135 = pneg %p34
      %p136 = pneg %p31
      %s137 = smul.u32 2, %s13
      %p138 = scmp.lt.s32.totalorder %s137, 3
      %s139 = scalar_select %p138, %s137, 3
      %s140 = smul.addr %s139, 8
      %s141 = scalar_lea.vmem %s1, %s140
      %p142 = pneg %p60
      %p143 = pneg %p57
      %p144 = pneg %p86
      %p145 = pneg %p83
      %s146 = smul.u32 2, %s13
      %p147 = scmp.lt.s32.totalorder %s146, 3
      %s148 = scalar_select %p147, %s146, 3
      %s149 = smul.addr %s148, 8
      %s150 = scalar_lea.vmem %s2, %s149
      %s151 = smul.u32 2, %s13
      %p152 = scmp.lt.s32.totalorder %s151, 3
      %s153 = scalar_select %p152, %s151, 3
      %s154 = smul.addr %s153, 8
      %s155 = scalar_lea.vmem %s0, %s154
      %s156 = smul.u32 2, %s13
      %s157 = smul.u32 2, %s13
      %p158 = scmp.lt.s32.totalorder %s157, 3
      %s159 = scalar_select %p158, %s157, 3
      %s160 = smul.addr %s159, 8
      %s161 = scalar_lea.vmem %s1, %s160
      %s162 = smul.u32 2, %s13
      %s163 = smul.u32 2, %s13
      %p164 = scmp.lt.s32.totalorder %s163, 3
      %s165 = scalar_select %p164, %s163, 3
      %s166 = smul.addr %s165, 8
      %s167 = scalar_lea.vmem %s2, %s166
      %s168 = smul.u32 2, %s13
      %v169 = vld [vmem:[%s155] sm:$0xff]
      %v170 = vld [vmem:[%s155 + $0x8] sm:$0xff]
      %vm171 = vcmask 130048
      %v172 = vsel %vm171, %v169, -inf
      %173 = vmax.xlane.f32.xlu0 %v172
      %v174 = vpop.xlane.xlu0 %173
      %v175 = vsel %vm171, %v170, -inf
      %176 = vmax.xlane.f32.xlu0 %v175
      %v177 = vpop.xlane.xlu0 %176
      %v178 = vsub.f32 %v169, %v174
      %v179 = vsub.f32 %v170, %v177
      %v180 = vmul.f32 %v178, 1.442695
      %v181 = vpow.pop %v180
      %v182 = vmul.f32 %v179, 1.442695
      %v183 = vpow.pop %v182
      %v184 = vsel %vm171, %v181, 0.0
      %185 = vadd.xlane.f32.xlu0 %v184
      %v186 = vpop.xlane.xlu0 %185
      %v187 = vsel %vm171, %v183, 0.0
      %188 = vadd.xlane.f32.xlu0 %v187
      %v189 = vpop.xlane.xlu0 %188
      %v190 = vrcp.pop %v186
      %v191 = vrcp.pop %v189
      %v192 = vmul.f32 %v181, %v190
      %v193 = vmul.f32 %v183, %v191
      %v194 = vmax.f32 %v192, 1e-07
      %v195 = vmax.f32 %v193, 1e-07
      %v196 = vmin.f32 %v194, 1.0
      %v197 = vmin.f32 %v195, 1.0
      %v198 = vld [vmem:[%s161] sm:$0xff]
      %v199 = vld [vmem:[%s161 + $0x8] sm:$0xff]
      %v200 = vcvt.f32.s32.to.zero.pseudo %v198
      %v201 = vcvt.f32.s32.to.zero.pseudo %v199
      %v202 = vlaneseq
      %v203 = vand.u32 %v202, 127
      %204 = vset.pattern.permute.xlu0 0
      %205 = vperm.xlu0 %204, %v200
      %v206 = vpop.permute.xlu0 %205
      %207 = vset.pattern.permute.xlu0 0
      %208 = vperm.xlu0 %207, %v201
      %v209 = vpop.permute.xlu0 %208
      %vm210 = vcmp.eq.s32.totalorder %v203, %v206
      %vm211 = vcmp.eq.s32.totalorder %v203, %v209
      %v212 = vsel %vm210, 0.0, %v196
      %v213 = vsel %vm211, 0.0, %v197
      %v214 = vsel %vm171, %v212, 0.0
      %215 = vadd.xlane.f32.xlu0 %v214
      %v216 = vpop.xlane.xlu0 %215
      %v217 = vsel %vm171, %v213, 0.0
      %218 = vadd.xlane.f32.xlu0 %v217
      %v219 = vpop.xlane.xlu0 %218
      %v220 = vmul.f32 %v216, %v198
      %v221 = vmul.f32 %v219, %v199
      %224 = vrot.lane.b32.xlu0 %v220, 127
      %v225 = vpop.permute.xlu0 %224
      %226 = vrot.lane.b32.xlu0 %v221, 127
      %v227 = vpop.permute.xlu0 %226
      %vm230 = vcmask 7168
      %231 = vst.msk [vmem:[%s167] sm:$0xff] %vm230, %v225
      %232 = vst.msk [vmem:[%s167 + $0x8] sm:$0xff] %vm230, %v227
      %s233 = smul.u32 2, %s13
      %p234 = scmp.lt.s32.totalorder %s233, 3
      %s235 = scalar_select %p234, %s233, 3
      %s236 = smul.addr %s235, 8
      %s237 = scalar_lea.vmem %s2, %s236
      // Predicated region
      $region29: #{tpu_custom_call.1} parent=27 // pred_check
        %p238 = pneg %p83
      $region30: #{tpu_custom_call.1} parent=27 // pred_check_branch
        %240 = sbr.rel (%p238) target = $region32
      $region31: #{tpu_custom_call.1} parent=27 // pred_region
        %s241 = smul.u32 2, %s13
      $region32: #{tpu_custom_call.1} parent=27 // pred_fallthru
        _
    $region28: #{tpu_custom_call.1} parent=5 // pred_fallthru
      _
    %p242 = scmp.le.s32.totalorder 2, %s8
    // Predicated region
    $region33: #{tpu_custom_call.1} parent=5 // pred_check
      %p243 = pneg %p242
    $region34: #{tpu_custom_call.1} parent=5 // pred_check_branch
      %245 = sbr.rel (%p243) target = $region36
    $region35: #{tpu_custom_call.1} parent=5 // pred_region
      %s246 = ssub.s32 %s8, 2
      // Predicated region
      $region37: #{tpu_custom_call.1} parent=35 // pred_check
        %p247 = pneg %p89
      $region38: #{tpu_custom_call.1} parent=35 // pred_check_branch
        %249 = sbr.rel (%p247) target = $region40
      $region39: #{tpu_custom_call.1} parent=35 // pred_region
        %s250 = smul.u32 2, %s14
        %p251 = scmp.lt.s32.totalorder %s250, 3
        %s252 = scalar_select %p251, %s250, 3
        %s253 = smul.addr %s252, 8
        %s254 = scalar_lea.vmem %s2, %s253
      $region40: #{tpu_custom_call.1} parent=35 // pred_fallthru
        _
    $region36: #{tpu_custom_call.1} parent=5 // pred_fallthru
      _
  $region6: #{tpu_custom_call.1} parent=0 // loop_footer
    %s12 = sadd.s32 1, %s8
  $region7: #{tpu_custom_call.1} parent=0 // loop_footer_branch
    %7 = sbr.rel target = $region3
  $region8: #{tpu_custom_call.1} parent=0 // loop_exit
    _

</llo_original>
